<compile_context>
chip_gen: v7x
topology: tpu7x:2x2x1
jax: 0.10.0
libtpu: 0.0.40
codegen_flags: <defaults>
</compile_context>

<pallas_src>
import jax
import jax.numpy as jnp
from jax.experimental import pallas as pl
from jax.experimental.pallas import tpu as pltpu

LANE = 128
SUBLANE = 8


def trsf_trn_kernel(x_ref, wf_ref, bf_ref, w2_ref, b2_ref, w3_ref, b3_ref,
                    out_ref):
    x = x_ref[...]                                                   # (TM, Dp)

    # Fused (branch projections -> cat -> Linear(320,128)) -> ReLU
    h1 = jnp.dot(x, wf_ref[...],
                 preferred_element_type=jnp.float32) + bf_ref[...]   # (TM, 128)
    h1 = jnp.maximum(h1, 0.0)

    # Linear(128,64) -> ReLU   (width zero-padded to 128 lanes; exact)
    h2 = jnp.dot(h1, w2_ref[...],
                 preferred_element_type=jnp.float32) + b2_ref[...]   # (TM, 128)
    h2 = jnp.maximum(h2, 0.0)

    # Dropout(p=0.2) is identity at inference time (eval mode).
    # Linear(64, out) with output columns zero-padded to 128 lanes.
    out_ref[...] = jnp.dot(h2, w3_ref[...],
                           preferred_element_type=jnp.float32) + b3_ref[...]


def prepare_fused_params(params, output_size):
    """One-time f32 preprocessing: algebraic fusion + lane padding."""
    d = params["wb"].shape[0]
    d_pad = LANE * pl.cdiv(d, LANE)
    h2_pad = LANE                                   # hidden 64 -> 128 lanes
    n_pad = LANE * pl.cdiv(output_size, LANE)

    # Exact fusion of the branch projection with the first `final` linear.
    w_fused = jnp.dot(params["wb"], params["w1"],
                      preferred_element_type=jnp.float32)            # (D, 128)
    b_fused = jnp.dot(params["bb"], params["w1"],
                      preferred_element_type=jnp.float32) + params["b1"]

    # Zero-pad contraction rows (D -> Dp): x is padded with zero columns too.
    wf = jnp.zeros((d_pad, 128), jnp.float32).at[:d, :].set(w_fused)

    # Zero-pad hidden width 64 -> 128 (exact: ReLU(0)=0, padded w3 rows = 0).
    w2 = jnp.zeros((128, h2_pad), jnp.float32).at[:, :64].set(params["w2"])
    b2 = jnp.zeros((1, h2_pad), jnp.float32).at[:, :64].set(params["b2"][0])

    # Zero-pad the output head so stores are lane-dense.
    w3 = jnp.zeros((h2_pad, n_pad), jnp.float32).at[:64, :output_size].set(
        params["w3"])
    b3 = jnp.zeros((1, n_pad), jnp.float32).at[:, :output_size].set(
        params["b3"][0])

    return dict(wf=wf, bf=b_fused, w2=w2, b2=b2, w3=w3, b3=b3,
                d=d, d_pad=d_pad, n_pad=n_pad)


def trsf_trn_forward(x_flat, fp, output_size, *, tm=None):
    """x_flat: (B, D) float32.  fp: output of prepare_fused_params."""
    B, D = x_flat.shape
    d_pad, n_pad = fp["d_pad"], fp["n_pad"]
    assert D == fp["d"]

    if d_pad != D:
        x_flat = jnp.pad(x_flat, ((0, 0), (0, d_pad - D)))

    # Row tile: multiple of 8 sublanes, capped (VMEM / pipelining friendly).
    if tm is None:
        tm = min(256, SUBLANE * pl.cdiv(B, SUBLANE))
    b_pad = tm * pl.cdiv(B, tm)
    if b_pad != B:
        x_flat = jnp.pad(x_flat, ((0, b_pad - B), (0, 0)))

    weights = (fp["wf"], fp["bf"], fp["w2"], fp["b2"], fp["w3"], fp["b3"])

    grid = (b_pad // tm,)
    in_specs = [pl.BlockSpec((tm, d_pad), lambda i: (i, 0))]        # x: row tiles
    in_specs += [pl.BlockSpec(w.shape, lambda i: (0, 0)) for w in weights]
    out_spec = pl.BlockSpec((tm, n_pad), lambda i: (i, 0))

    flops = 2 * b_pad * (d_pad * 128 + 128 * 128 + 128 * n_pad)
    bytes_accessed = 4 * (b_pad * d_pad + b_pad * n_pad
                          + sum(int(w.size) for w in weights))

    out_padded = pl.pallas_call(
        trsf_trn_kernel,
        out_shape=jax.ShapeDtypeStruct((b_pad, n_pad), jnp.float32),
        grid=grid,
        in_specs=in_specs,
        out_specs=out_spec,
        compiler_params=pltpu.CompilerParams(
            dimension_semantics=("parallel",),
            vmem_limit_bytes=32 << 20,
        ),
        cost_estimate=pl.CostEstimate(
            flops=flops, transcendentals=0, bytes_accessed=bytes_accessed),
    )(x_flat, *weights)

    return out_padded[:B, :output_size]


def init_params(key, in_features, output_size):
    """Deterministic init mimicking torch.nn.Linear defaults
    (uniform(-1/sqrt(fan_in), 1/sqrt(fan_in)))."""
    def linear(k, fan_in, fan_out):
        kw, kb = jax.random.split(k)
        bound = 1.0 / jnp.sqrt(jnp.float32(fan_in))
        w = jax.random.uniform(kw, (fan_in, fan_out), jnp.float32, -bound, bound)
        b = jax.random.uniform(kb, (1, fan_out), jnp.float32, -bound, bound)
        return w, b

    keys = jax.random.split(key, 4)
    # Stand-in fused branch projection: D -> 5*64 (TN | RN | SN | FC | TRN).
    wb, bb = linear(keys[0], in_features, 5 * 64)
    w1, b1 = linear(keys[1], 320, 128)
    w2, b2 = linear(keys[2], 128, 64)
    w3, b3 = linear(keys[3], 64, output_size)
    return dict(wb=wb, bb=bb, w1=w1, b1=b1, w2=w2, b2=b2, w3=w3, b3=b3)


if __name__ == "__main__":
    # Small shapes consistent with the module: batch=2, input_size=(seq=8, hidden=32).
    B, SEQ, HID = 2, 8, 32
    OUTPUT_SIZE = 10

    key = jax.random.PRNGKey(0)
    kx, kp = jax.random.split(key)

    x = jax.random.normal(kx, (B, SEQ, HID), dtype=jnp.float32)
    x_flat = x.reshape(B, SEQ * HID)            # glue: flatten outside the kernel

    params = init_params(kp, SEQ * HID, OUTPUT_SIZE)
    fused_params = prepare_fused_params(params, OUTPUT_SIZE)   # one-time, f32

    result = trsf_trn_forward(x_flat, fused_params, OUTPUT_SIZE)
    jax.block_until_ready(result)

    # Pure-JAX reference through the UNFUSED / UNPADDED path: checks that the
    # algebraic fusion and all zero-padding are exact.
    cat = x_flat @ params["wb"] + params["bb"]
    h1 = jnp.maximum(cat @ params["w1"] + params["b1"], 0.0)
    h2 = jnp.maximum(h1 @ params["w2"] + params["b2"], 0.0)
    ref = h2 @ params["w3"] + params["b3"]
    assert jnp.allclose(result, ref, atol=1e-4, rtol=1e-4)

    assert result.shape == (B, OUTPUT_SIZE)
    assert result.dtype == jnp.float32
    print("KERNEL_OK")
</pallas_src>

<mosaic_0001>
module attributes {stable_mosaic.version = 11 : i64} {
  func.func @trsf_trn_kernel(%arg0: i32, %arg1: memref<8x256xf32, #tpu.memory_space<vmem>>, %arg2: memref<256x128xf32, #tpu.memory_space<vmem>>, %arg3: memref<1x128xf32, #tpu.memory_space<vmem>>, %arg4: memref<128x128xf32, #tpu.memory_space<vmem>>, %arg5: memref<1x128xf32, #tpu.memory_space<vmem>>, %arg6: memref<128x128xf32, #tpu.memory_space<vmem>>, %arg7: memref<1x128xf32, #tpu.memory_space<vmem>>, %arg8: memref<8x128xf32, #tpu.memory_space<vmem>>) attributes {dimension_semantics = [#tpu.dimension_semantics<parallel>], iteration_bounds = array<i64: 1>, scalar_prefetch = 0 : i64, scratch_operands = 0 : i64, tpu.core_type = #tpu.core_type<tc>, window_params = [{transform_indices = @transform_0, window_bounds = array<i64: 8, 256>}, {pipeline_mode = #tpu.pipeline_mode<synchronous>, transform_indices = @transform_1, window_bounds = array<i64: 256, 128>}, {pipeline_mode = #tpu.pipeline_mode<synchronous>, transform_indices = @transform_2, window_bounds = array<i64: 1, 128>}, {pipeline_mode = #tpu.pipeline_mode<synchronous>, transform_indices = @transform_3, window_bounds = array<i64: 128, 128>}, {pipeline_mode = #tpu.pipeline_mode<synchronous>, transform_indices = @transform_4, window_bounds = array<i64: 1, 128>}, {pipeline_mode = #tpu.pipeline_mode<synchronous>, transform_indices = @transform_5, window_bounds = array<i64: 128, 128>}, {pipeline_mode = #tpu.pipeline_mode<synchronous>, transform_indices = @transform_6, window_bounds = array<i64: 1, 128>}, {transform_indices = @transform_7, window_bounds = array<i64: 8, 128>}]} {
    %c0 = arith.constant 0 : index
    %c0_0 = arith.constant 0 : index
    %0 = vector.load %arg1[%c0, %c0_0] : memref<8x256xf32, #tpu.memory_space<vmem>>, vector<8x256xf32>
    %c0_1 = arith.constant 0 : index
    %c0_2 = arith.constant 0 : index
    %1 = vector.load %arg2[%c0_1, %c0_2] : memref<256x128xf32, #tpu.memory_space<vmem>>, vector<256x128xf32>
    %cst = arith.constant dense<0.000000e+00> : vector<8x128xf32>
    %2 = tpu.matmul %0, %1, %cst {dimension_numbers = #tpu.dot_dimension_numbers<[1], [0], [0], [1], [0, 0, 1, 1], [], []>} : vector<8x256xf32>, vector<256x128xf32>, vector<8x128xf32> -> vector<8x128xf32>
    %c0_3 = arith.constant 0 : index
    %c0_4 = arith.constant 0 : index
    %3 = vector.load %arg3[%c0_3, %c0_4] : memref<1x128xf32, #tpu.memory_space<vmem>>, vector<1x128xf32>
    %4 = vector.broadcast %3 : vector<1x128xf32> to vector<8x128xf32>
    %5 = arith.addf %2, %4 : vector<8x128xf32>
    %cst_5 = arith.constant 0.000000e+00 : f32
    %6 = vector.broadcast %cst_5 : f32 to vector<8x128xf32>
    %7 = arith.maximumf %5, %6 : vector<8x128xf32>
    %c0_6 = arith.constant 0 : index
    %c0_7 = arith.constant 0 : index
    %8 = vector.load %arg4[%c0_6, %c0_7] : memref<128x128xf32, #tpu.memory_space<vmem>>, vector<128x128xf32>
    %cst_8 = arith.constant dense<0.000000e+00> : vector<8x128xf32>
    %9 = tpu.matmul %7, %8, %cst_8 {dimension_numbers = #tpu.dot_dimension_numbers<[1], [0], [0], [1], [0, 0, 1, 1], [], []>} : vector<8x128xf32>, vector<128x128xf32>, vector<8x128xf32> -> vector<8x128xf32>
    %c0_9 = arith.constant 0 : index
    %c0_10 = arith.constant 0 : index
    %10 = vector.load %arg5[%c0_9, %c0_10] : memref<1x128xf32, #tpu.memory_space<vmem>>, vector<1x128xf32>
    %11 = vector.broadcast %10 : vector<1x128xf32> to vector<8x128xf32>
    %12 = arith.addf %9, %11 : vector<8x128xf32>
    %cst_11 = arith.constant 0.000000e+00 : f32
    %13 = vector.broadcast %cst_11 : f32 to vector<8x128xf32>
    %14 = arith.maximumf %12, %13 : vector<8x128xf32>
    %c0_12 = arith.constant 0 : index
    %c0_13 = arith.constant 0 : index
    %15 = vector.load %arg6[%c0_12, %c0_13] : memref<128x128xf32, #tpu.memory_space<vmem>>, vector<128x128xf32>
    %cst_14 = arith.constant dense<0.000000e+00> : vector<8x128xf32>
    %16 = tpu.matmul %14, %15, %cst_14 {dimension_numbers = #tpu.dot_dimension_numbers<[1], [0], [0], [1], [0, 0, 1, 1], [], []>} : vector<8x128xf32>, vector<128x128xf32>, vector<8x128xf32> -> vector<8x128xf32>
    %c0_15 = arith.constant 0 : index
    %c0_16 = arith.constant 0 : index
    %17 = vector.load %arg7[%c0_15, %c0_16] : memref<1x128xf32, #tpu.memory_space<vmem>>, vector<1x128xf32>
    %18 = vector.broadcast %17 : vector<1x128xf32> to vector<8x128xf32>
    %19 = arith.addf %16, %18 : vector<8x128xf32>
    %c0_17 = arith.constant 0 : index
    %c0_18 = arith.constant 0 : index
    %20 = vector.load %arg8[%c0_17, %c0_18] : memref<8x128xf32, #tpu.memory_space<vmem>>, vector<8x128xf32>
    tpu.vector_store %arg8[%c0_17, %c0_18], %19 {strides = array<i32>} : memref<8x128xf32, #tpu.memory_space<vmem>>, vector<8x128xf32>,
    return
  }
  func.func @transform_0(%arg0: i32) -> (i32, i32) {
    %c0_i32 = arith.constant 0 : i32
    %c0_i32_0 = arith.constant 0 : i32
    return %arg0, %c0_i32 : i32, i32
  }
  func.func @transform_1(%arg0: i32) -> (i32, i32) {
    %c0_i32 = arith.constant 0 : i32
    %c0_i32_0 = arith.constant 0 : i32
    %c0_i32_1 = arith.constant 0 : i32
    return %c0_i32, %c0_i32_0 : i32, i32
  }
  func.func @transform_2(%arg0: i32) -> (i32, i32) {
    %c0_i32 = arith.constant 0 : i32
    %c0_i32_0 = arith.constant 0 : i32
    %c0_i32_1 = arith.constant 0 : i32
    return %c0_i32, %c0_i32_0 : i32, i32
  }
  func.func @transform_3(%arg0: i32) -> (i32, i32) {
    %c0_i32 = arith.constant 0 : i32
    %c0_i32_0 = arith.constant 0 : i32
    %c0_i32_1 = arith.constant 0 : i32
    return %c0_i32, %c0_i32_0 : i32, i32
  }
  func.func @transform_4(%arg0: i32) -> (i32, i32) {
    %c0_i32 = arith.constant 0 : i32
    %c0_i32_0 = arith.constant 0 : i32
    %c0_i32_1 = arith.constant 0 : i32
    return %c0_i32, %c0_i32_0 : i32, i32
  }
  func.func @transform_5(%arg0: i32) -> (i32, i32) {
    %c0_i32 = arith.constant 0 : i32
    %c0_i32_0 = arith.constant 0 : i32
    %c0_i32_1 = arith.constant 0 : i32
    return %c0_i32, %c0_i32_0 : i32, i32
  }
  func.func @transform_6(%arg0: i32) -> (i32, i32) {
    %c0_i32 = arith.constant 0 : i32
    %c0_i32_0 = arith.constant 0 : i32
    %c0_i32_1 = arith.constant 0 : i32
    return %c0_i32, %c0_i32_0 : i32, i32
  }
  func.func @transform_7(%arg0: i32) -> (i32, i32) {
    %c0_i32 = arith.constant 0 : i32
    %c0_i32_0 = arith.constant 0 : i32
    return %arg0, %c0_i32 : i32, i32
  }
}

</mosaic_0001>

<llo_original>
// kernel: tpu_custom_call.1
$region0: #{tpu_custom_call.1}
  #allocation0 [shape = 'u32[]', space=smem, size = 0x4, offset = 0x4, fixed_abs, tag = 'smem constant byte address 0x4 - core index']
  #allocation1 [shape = 'u32[144,128]{1,0:T(1,128)}', space=vmem, size = 0x12000, scoped, tag = 'internal scratch']
  %s0 = inlined_call_operand.hbm [shape: f32[8,256], index: 0, kind: input, shape index: {}]
  %s1 = inlined_call_operand.hbm [shape: f32[256,128], index: 1, kind: input, shape index: {}]
  %s2 = inlined_call_operand.vmem [shape: f32[1,128], index: 2, kind: input, shape index: {}]
  %s3 = inlined_call_operand.hbm [shape: f32[128,128], index: 3, kind: input, shape index: {}]
  %s4 = inlined_call_operand.vmem [shape: f32[1,128], index: 4, kind: input, shape index: {}]
  %s5 = inlined_call_operand.hbm [shape: f32[128,128], index: 5, kind: input, shape index: {}]
  %s6 = inlined_call_operand.vmem [shape: f32[1,128], index: 6, kind: input, shape index: {}]
  %s7 = inlined_call_operand.hbm [shape: f32[8,128], index: 7, kind: output, shape index: {}]
  %s8 = sld [smem:[#allocation0]]
  $region54: #{tpu_custom_call.1} parent=0
    _
  %s10 = ssub.s32 1, %s8
  %s11 = scalar_select 0, %s10, %s8
  $region1: #{tpu_custom_call.1} parent=0
    #allocation2 [shape = 'u8[8192]{0}', space=vmem, size = 0x2000, scoped, tag = 'input window, operand 0, single buffered']
    #allocation3 [shape = 's32[1]{0}', space=sflag, size = 0x4, scoped, tag = 'scoped memory for tpu_custom_call.1']
    #allocation4 [shape = 's32[1]{0}', space=sflag, size = 0x4, scoped, tag = 'scoped memory for tpu_custom_call.1']
    #allocation5 [shape = 'u8[131072]{0}', space=vmem, size = 0x20000, scoped, tag = 'input window, operand 1, single buffered']
    #allocation6 [shape = 's32[1]{0}', space=sflag, size = 0x4, scoped, tag = 'scoped memory for tpu_custom_call.1']
    #allocation7 [shape = 'u8[65536]{0}', space=vmem, size = 0x10000, scoped, tag = 'input window, operand 3, single buffered']
    #allocation8 [shape = 'u8[65536]{0}', space=vmem, size = 0x10000, scoped, tag = 'input window, operand 5, single buffered']
    #allocation9 [shape = 's32[1]{0}', space=sflag, size = 0x4, scoped, tag = 'scoped memory for tpu_custom_call.1']
    #allocation10 [shape = 'u8[4096]{0}', space=vmem, size = 0x1000, scoped, tag = 'output window, operand 0, single buffered']
    %12 = vsyncpa [#allocation3], 0
    %13 = vsyncpa [#allocation6], 0
    %14 = vsyncpa [#allocation9], 0
    %15 = vsyncpa [#allocation4], 0
    // Predicated region
    $region2: #{tpu_custom_call.1} parent=1 // pred_check
      _
    $region3: #{tpu_custom_call.1} parent=1 // pred_check_branch
      %17 = sbr.rel (0) target = $region5
    $region4: #{tpu_custom_call.1} parent=1 // pred_region
      %s19 = ssub.s32 256, 256
      %20 = vsyncadd [#allocation3], %s19
      %s22 = sshll.u32 [#allocation2], 4
      %s23 = int_to_ptr.vmem [resolvable:$true] %s22
      %25 = dma.hbm_to_vmem [thread:$0]  %s0, 256, %s23, [#allocation3]
    $region5: #{tpu_custom_call.1} parent=1 // pred_fallthru
      _
    // Predicated region
    $region6: #{tpu_custom_call.1} parent=1 // pred_check
      _
    $region7: #{tpu_custom_call.1} parent=1 // pred_check_branch
      %27 = sbr.rel (0) target = $region9
    $region8: #{tpu_custom_call.1} parent=1 // pred_region
      %s29 = ssub.s32 4096, 4096
      %30 = vsyncadd [#allocation6], %s29
      %s31 = sshll.u32 [#allocation5], 4
      %s32 = int_to_ptr.vmem [resolvable:$true] %s31
      %37 = dma.hbm_to_vmem [thread:$0]  %s1, 4096, %s32, [#allocation6], 128, 128, 8
    $region9: #{tpu_custom_call.1} parent=1 // pred_fallthru
      _
    // Predicated region
    $region10: #{tpu_custom_call.1} parent=1 // pred_check
      _
    $region11: #{tpu_custom_call.1} parent=1 // pred_check_branch
      %39 = sbr.rel (0) target = $region13
    $region12: #{tpu_custom_call.1} parent=1 // pred_region
      _
    $region13: #{tpu_custom_call.1} parent=1 // pred_fallthru
      _
    // Predicated region
    $region14: #{tpu_custom_call.1} parent=1 // pred_check
      _
    $region15: #{tpu_custom_call.1} parent=1 // pred_check_branch
      %41 = sbr.rel (0) target = $region17
    $region16: #{tpu_custom_call.1} parent=1 // pred_region
      %s43 = ssub.s32 2048, 2048
      %44 = vsyncadd [#allocation6], %s43
      %s45 = sshll.u32 [#allocation7], 4
      %s46 = int_to_ptr.vmem [resolvable:$true] %s45
      %51 = dma.hbm_to_vmem [thread:$0]  %s3, 2048, %s46, [#allocation6], 128, 128, 8
    $region17: #{tpu_custom_call.1} parent=1 // pred_fallthru
      _
    // Predicated region
    $region18: #{tpu_custom_call.1} parent=1 // pred_check
      _
    $region19: #{tpu_custom_call.1} parent=1 // pred_check_branch
      %53 = sbr.rel (0) target = $region21
    $region20: #{tpu_custom_call.1} parent=1 // pred_region
      _
    $region21: #{tpu_custom_call.1} parent=1 // pred_fallthru
      _
    // Predicated region
    $region22: #{tpu_custom_call.1} parent=1 // pred_check
      _
    $region23: #{tpu_custom_call.1} parent=1 // pred_check_branch
      %55 = sbr.rel (0) target = $region25
    $region24: #{tpu_custom_call.1} parent=1 // pred_region
      %s57 = ssub.s32 2048, 2048
      %58 = vsyncadd [#allocation9], %s57
      %s59 = sshll.u32 [#allocation8], 4
      %s60 = int_to_ptr.vmem [resolvable:$true] %s59
      %65 = dma.hbm_to_vmem [thread:$0]  %s5, 2048, %s60, [#allocation9], 128, 128, 8
    $region25: #{tpu_custom_call.1} parent=1 // pred_fallthru
      _
    // Predicated region
    $region26: #{tpu_custom_call.1} parent=1 // pred_check
      _
    $region27: #{tpu_custom_call.1} parent=1 // pred_check_branch
      %67 = sbr.rel (0) target = $region29
    $region28: #{tpu_custom_call.1} parent=1 // pred_region
      _
    $region29: #{tpu_custom_call.1} parent=1 // pred_fallthru
      _
    // Predicated region
    $region30: #{tpu_custom_call.1} parent=1 // pred_check
      _
    $region31: #{tpu_custom_call.1} parent=1 // pred_check_branch
      %69 = sbr.rel (0) target = $region33
    $region32: #{tpu_custom_call.1} parent=1 // pred_region
      %70 = dma.done [#allocation3], 256
    $region33: #{tpu_custom_call.1} parent=1 // pred_fallthru
      _
    // Predicated region
    $region34: #{tpu_custom_call.1} parent=1 // pred_check
      _
    $region35: #{tpu_custom_call.1} parent=1 // pred_check_branch
      %72 = sbr.rel (0) target = $region37
    $region36: #{tpu_custom_call.1} parent=1 // pred_region
      %73 = dma.done [#allocation6], 4096
    $region37: #{tpu_custom_call.1} parent=1 // pred_fallthru
      _
    // Predicated region
    $region38: #{tpu_custom_call.1} parent=1 // pred_check
      _
    $region39: #{tpu_custom_call.1} parent=1 // pred_check_branch
      %75 = sbr.rel (0) target = $region41
    $region40: #{tpu_custom_call.1} parent=1 // pred_region
      %76 = dma.done [#allocation6], 2048
    $region41: #{tpu_custom_call.1} parent=1 // pred_fallthru
      _
    // Predicated region
    $region42: #{tpu_custom_call.1} parent=1 // pred_check
      _
    $region43: #{tpu_custom_call.1} parent=1 // pred_check_branch
      %78 = sbr.rel (0) target = $region45
    $region44: #{tpu_custom_call.1} parent=1 // pred_region
      %79 = dma.done [#allocation9], 2048
    $region45: #{tpu_custom_call.1} parent=1 // pred_fallthru
      _
    %v80 = vld [vmem:[#allocation2] sm:$0xff]
    %v81 = vld [vmem:[#allocation2 + $0x8] sm:$0xff]
    %v82 = vld [vmem:[#allocation5] sm:$0xff]
    %v83 = vld [vmem:[#allocation5 + $0x8] sm:$0xff]
    %v84 = vld [vmem:[#allocation5 + $0x10] sm:$0xff]
    %v85 = vld [vmem:[#allocation5 + $0x18] sm:$0xff]
    %v86 = vld [vmem:[#allocation5 + $0x20] sm:$0xff]
    %v87 = vld [vmem:[#allocation5 + $0x28] sm:$0xff]
    %v88 = vld [vmem:[#allocation5 + $0x30] sm:$0xff]
    %v89 = vld [vmem:[#allocation5 + $0x38] sm:$0xff]
    %v90 = vld [vmem:[#allocation5 + $0x40] sm:$0xff]
    %v91 = vld [vmem:[#allocation5 + $0x48] sm:$0xff]
    %v92 = vld [vmem:[#allocation5 + $0x50] sm:$0xff]
    %v93 = vld [vmem:[#allocation5 + $0x58] sm:$0xff]
    %v94 = vld [vmem:[#allocation5 + $0x60] sm:$0xff]
    %v95 = vld [vmem:[#allocation5 + $0x68] sm:$0xff]
    %v96 = vld [vmem:[#allocation5 + $0x70] sm:$0xff]
    %v97 = vld [vmem:[#allocation5 + $0x78] sm:$0xff]
    %v98 = vld [vmem:[#allocation5 + $0x80] sm:$0xff]
    %v99 = vld [vmem:[#allocation5 + $0x88] sm:$0xff]
    %v100 = vld [vmem:[#allocation5 + $0x90] sm:$0xff]
    %v101 = vld [vmem:[#allocation5 + $0x98] sm:$0xff]
    %v102 = vld [vmem:[#allocation5 + $0xa0] sm:$0xff]
    %v103 = vld [vmem:[#allocation5 + $0xa8] sm:$0xff]
    %v104 = vld [vmem:[#allocation5 + $0xb0] sm:$0xff]
    %v105 = vld [vmem:[#allocation5 + $0xb8] sm:$0xff]
    %v106 = vld [vmem:[#allocation5 + $0xc0] sm:$0xff]
    %v107 = vld [vmem:[#allocation5 + $0xc8] sm:$0xff]
    %v108 = vld [vmem:[#allocation5 + $0xd0] sm:$0xff]
    %v109 = vld [vmem:[#allocation5 + $0xd8] sm:$0xff]
    %v110 = vld [vmem:[#allocation5 + $0xe0] sm:$0xff]
    %v111 = vld [vmem:[#allocation5 + $0xe8] sm:$0xff]
    %v112 = vld [vmem:[#allocation5 + $0xf0] sm:$0xff]
    %v113 = vld [vmem:[#allocation5 + $0xf8] sm:$0xff]
    %v114 = vld [vmem:[%s2] sm:$0x1]
    %v116 = vlaneseq
    %v117 = vshrl.u32 %v116, 7
    %v118 = vsub.s32 0, %v117
    %v119 = vrot.slane %v114, %v118
    %121 = vmatprep.subr.mxu0 0.0
    %122 = vmatpush1.msra.mxu0 %v82
    %123 = vmatprep.subr.mxu0 0.0
    %124 = vmatpush1.msra.mxu0 %v83
    %125 = vmatprep.subr.mxu0 0.0
    %126 = vmatpush1.msra.mxu0 %v84
    %127 = vmatprep.subr.mxu0 0.0
    %128 = vmatpush1.msra.mxu0 %v85
    %129 = vmatprep.subr.mxu0 0.0
    %130 = vmatpush1.msra.mxu0 %v86
    %131 = vmatprep.subr.mxu0 0.0
    %132 = vmatpush1.msra.mxu0 %v87
    %133 = vmatprep.subr.mxu0 0.0
    %134 = vmatpush1.msra.mxu0 %v88
    %135 = vmatprep.subr.mxu0 0.0
    %136 = vmatpush1.msra.mxu0 %v89
    %137 = vmatprep.subr.mxu0 0.0
    %138 = vmatpush1.msra.mxu0 %v90
    %139 = vmatprep.subr.mxu0 0.0
    %140 = vmatpush1.msra.mxu0 %v91
    %141 = vmatprep.subr.mxu0 0.0
    %142 = vmatpush1.msra.mxu0 %v92
    %143 = vmatprep.subr.mxu0 0.0
    %144 = vmatpush1.msra.mxu0 %v93
    %145 = vmatprep.subr.mxu0 0.0
    %146 = vmatpush1.msra.mxu0 %v94
    %147 = vmatprep.subr.mxu0 0.0
    %148 = vmatpush1.msra.mxu0 %v95
    %149 = vmatprep.subr.mxu0 0.0
    %150 = vmatpush1.msra.mxu0 %v96
    %151 = vmatprep.subr.mxu0 0.0
    %152 = vmatpush1.msra.mxu0 %v97
    %153 = vmatprep.subr.mxu0 0.0
    %154 = vmatpush1.msra.mxu0 %v98
    %155 = vmatprep.subr.mxu0 0.0
    %156 = vmatpush1.msra.mxu0 %v99
    %157 = vmatprep.subr.mxu0 0.0
    %158 = vmatpush1.msra.mxu0 %v100
    %159 = vmatprep.subr.mxu0 0.0
    %160 = vmatpush1.msra.mxu0 %v101
    %161 = vmatprep.subr.mxu0 0.0
    %162 = vmatpush1.msra.mxu0 %v102
    %163 = vmatprep.subr.mxu0 0.0
    %164 = vmatpush1.msra.mxu0 %v103
    %165 = vmatprep.subr.mxu0 0.0
    %166 = vmatpush1.msra.mxu0 %v104
    %167 = vmatprep.subr.mxu0 0.0
    %168 = vmatpush1.msra.mxu0 %v105
    %169 = vmatprep.subr.mxu0 0.0
    %170 = vmatpush1.msra.mxu0 %v106
    %171 = vmatprep.subr.mxu0 0.0
    %172 = vmatpush1.msra.mxu0 %v107
    %173 = vmatprep.subr.mxu0 0.0
    %174 = vmatpush1.msra.mxu0 %v108
    %175 = vmatprep.subr.mxu0 0.0
    %176 = vmatpush1.msra.mxu0 %v109
    %177 = vmatprep.subr.mxu0 0.0
    %178 = vmatpush1.msra.mxu0 %v110
    %179 = vmatprep.subr.mxu0 0.0
    %180 = vmatpush1.msra.mxu0 %v111
    %181 = vmatprep.subr.mxu0 0.0
    %182 = vmatpush1.msra.mxu0 %v112
    %183 = vmatprep.subr.mxu0 0.0
    %184 = vmatpush1.msra.mxu0 %v113
    %185 = vmatprep.mubr.f32.mxu0 %v81
    %186 = vmatmul.mubr.f32.gmra.mrb[0].mxu0 %v80
    %v187 = vpop.f32.mrb[0].mxu0
    %v188 = vadd.f32 %v119, %v187
    %v189 = vpop.f32.mrb[0].mxu0
    %190 = vdwg.mxu0
    %v191 = vmax.f32 %v188, 0.0
    %v192 = vld [vmem:[#allocation7] sm:$0xff]
    %v193 = vld [vmem:[#allocation7 + $0x8] sm:$0xff]
    %v194 = vld [vmem:[#allocation7 + $0x10] sm:$0xff]
    %v195 = vld [vmem:[#allocation7 + $0x18] sm:$0xff]
    %v196 = vld [vmem:[#allocation7 + $0x20] sm:$0xff]
    %v197 = vld [vmem:[#allocation7 + $0x28] sm:$0xff]
    %v198 = vld [vmem:[#allocation7 + $0x30] sm:$0xff]
    %v199 = vld [vmem:[#allocation7 + $0x38] sm:$0xff]
    %v200 = vld [vmem:[#allocation7 + $0x40] sm:$0xff]
    %v201 = vld [vmem:[#allocation7 + $0x48] sm:$0xff]
    %v202 = vld [vmem:[#allocation7 + $0x50] sm:$0xff]
    %v203 = vld [vmem:[#allocation7 + $0x58] sm:$0xff]
    %v204 = vld [vmem:[#allocation7 + $0x60] sm:$0xff]
    %v205 = vld [vmem:[#allocation7 + $0x68] sm:$0xff]
    %v206 = vld [vmem:[#allocation7 + $0x70] sm:$0xff]
    %v207 = vld [vmem:[#allocation7 + $0x78] sm:$0xff]
    %v208 = vld [vmem:[%s4] sm:$0x1]
    %v210 = vlaneseq
    %v211 = vshrl.u32 %v210, 7
    %v212 = vsub.s32 0, %v211
    %v213 = vrot.slane %v208, %v212
    %215 = vmatprep.subr.mxu0 0.0
    %216 = vmatpush1.msra.mxu0 %v192
    %217 = vmatprep.subr.mxu0 0.0
    %218 = vmatpush1.msra.mxu0 %v193
    %219 = vmatprep.subr.mxu0 0.0
    %220 = vmatpush1.msra.mxu0 %v194
    %221 = vmatprep.subr.mxu0 0.0
    %222 = vmatpush1.msra.mxu0 %v195
    %223 = vmatprep.subr.mxu0 0.0
    %224 = vmatpush1.msra.mxu0 %v196
    %225 = vmatprep.subr.mxu0 0.0
    %226 = vmatpush1.msra.mxu0 %v197
    %227 = vmatprep.subr.mxu0 0.0
    %228 = vmatpush1.msra.mxu0 %v198
    %229 = vmatprep.subr.mxu0 0.0
    %230 = vmatpush1.msra.mxu0 %v199
    %231 = vmatprep.subr.mxu0 0.0
    %232 = vmatpush1.msra.mxu0 %v200
    %233 = vmatprep.subr.mxu0 0.0
    %234 = vmatpush1.msra.mxu0 %v201
    %235 = vmatprep.subr.mxu0 0.0
    %236 = vmatpush1.msra.mxu0 %v202
    %237 = vmatprep.subr.mxu0 0.0
    %238 = vmatpush1.msra.mxu0 %v203
    %239 = vmatprep.subr.mxu0 0.0
    %240 = vmatpush1.msra.mxu0 %v204
    %241 = vmatprep.subr.mxu0 0.0
    %242 = vmatpush1.msra.mxu0 %v205
    %243 = vmatprep.subr.mxu0 0.0
    %244 = vmatpush1.msra.mxu0 %v206
    %245 = vmatprep.subr.mxu0 0.0
    %246 = vmatpush1.msra.mxu0 %v207
    %247 = vmatprep.subr.mxu0 0.0
    %248 = vmatpush1.msra.mxu0 0.0
    %249 = vmatprep.subr.mxu0 0.0
    %250 = vmatpush1.msra.mxu0 0.0
    %251 = vmatprep.subr.mxu0 0.0
    %252 = vmatpush1.msra.mxu0 0.0
    %253 = vmatprep.subr.mxu0 0.0
    %254 = vmatpush1.msra.mxu0 0.0
    %255 = vmatprep.subr.mxu0 0.0
    %256 = vmatpush1.msra.mxu0 0.0
    %257 = vmatprep.subr.mxu0 0.0
    %258 = vmatpush1.msra.mxu0 0.0
    %259 = vmatprep.subr.mxu0 0.0
    %260 = vmatpush1.msra.mxu0 0.0
    %261 = vmatprep.subr.mxu0 0.0
    %262 = vmatpush1.msra.mxu0 0.0
    %263 = vmatprep.subr.mxu0 0.0
    %264 = vmatpush1.msra.mxu0 0.0
    %265 = vmatprep.subr.mxu0 0.0
    %266 = vmatpush1.msra.mxu0 0.0
    %267 = vmatprep.subr.mxu0 0.0
    %268 = vmatpush1.msra.mxu0 0.0
    %269 = vmatprep.subr.mxu0 0.0
    %270 = vmatpush1.msra.mxu0 0.0
    %271 = vmatprep.subr.mxu0 0.0
    %272 = vmatpush1.msra.mxu0 0.0
    %273 = vmatprep.subr.mxu0 0.0
    %274 = vmatpush1.msra.mxu0 0.0
    %275 = vmatprep.subr.mxu0 0.0
    %276 = vmatpush1.msra.mxu0 0.0
    %277 = vmatprep.subr.mxu0 0.0
    %278 = vmatpush1.msra.mxu0 0.0
    %279 = vmatprep.mubr.f32.mxu0 0.0
    %280 = vmatmul.mubr.f32.gmra.mrb[0].mxu0 %v191
    %v281 = vpop.f32.mrb[0].mxu0
    %v282 = vadd.f32 %v213, %v281
    %v283 = vpop.f32.mrb[0].mxu0
    %284 = vdwg.mxu0
    %v285 = vmax.f32 %v282, 0.0
    %v286 = vld [vmem:[#allocation8] sm:$0xff]
    %v287 = vld [vmem:[#allocation8 + $0x8] sm:$0xff]
    %v288 = vld [vmem:[#allocation8 + $0x10] sm:$0xff]
    %v289 = vld [vmem:[#allocation8 + $0x18] sm:$0xff]
    %v290 = vld [vmem:[#allocation8 + $0x20] sm:$0xff]
    %v291 = vld [vmem:[#allocation8 + $0x28] sm:$0xff]
    %v292 = vld [vmem:[#allocation8 + $0x30] sm:$0xff]
    %v293 = vld [vmem:[#allocation8 + $0x38] sm:$0xff]
    %v294 = vld [vmem:[#allocation8 + $0x40] sm:$0xff]
    %v295 = vld [vmem:[#allocation8 + $0x48] sm:$0xff]
    %v296 = vld [vmem:[#allocation8 + $0x50] sm:$0xff]
    %v297 = vld [vmem:[#allocation8 + $0x58] sm:$0xff]
    %v298 = vld [vmem:[#allocation8 + $0x60] sm:$0xff]
    %v299 = vld [vmem:[#allocation8 + $0x68] sm:$0xff]
    %v300 = vld [vmem:[#allocation8 + $0x70] sm:$0xff]
    %v301 = vld [vmem:[#allocation8 + $0x78] sm:$0xff]
    %v302 = vld [vmem:[%s6] sm:$0x1]
    %v304 = vlaneseq
    %v305 = vshrl.u32 %v304, 7
    %v306 = vsub.s32 0, %v305
    %v307 = vrot.slane %v302, %v306
    %309 = vmatprep.subr.mxu0 0.0
    %310 = vmatpush1.msra.mxu0 %v286
    %311 = vmatprep.subr.mxu0 0.0
    %312 = vmatpush1.msra.mxu0 %v287
    %313 = vmatprep.subr.mxu0 0.0
    %314 = vmatpush1.msra.mxu0 %v288
    %315 = vmatprep.subr.mxu0 0.0
    %316 = vmatpush1.msra.mxu0 %v289
    %317 = vmatprep.subr.mxu0 0.0
    %318 = vmatpush1.msra.mxu0 %v290
    %319 = vmatprep.subr.mxu0 0.0
    %320 = vmatpush1.msra.mxu0 %v291
    %321 = vmatprep.subr.mxu0 0.0
    %322 = vmatpush1.msra.mxu0 %v292
    %323 = vmatprep.subr.mxu0 0.0
    %324 = vmatpush1.msra.mxu0 %v293
    %325 = vmatprep.subr.mxu0 0.0
    %326 = vmatpush1.msra.mxu0 %v294
    %327 = vmatprep.subr.mxu0 0.0
    %328 = vmatpush1.msra.mxu0 %v295
    %329 = vmatprep.subr.mxu0 0.0
    %330 = vmatpush1.msra.mxu0 %v296
    %331 = vmatprep.subr.mxu0 0.0
    %332 = vmatpush1.msra.mxu0 %v297
    %333 = vmatprep.subr.mxu0 0.0
    %334 = vmatpush1.msra.mxu0 %v298
    %335 = vmatprep.subr.mxu0 0.0
    %336 = vmatpush1.msra.mxu0 %v299
    %337 = vmatprep.subr.mxu0 0.0
    %338 = vmatpush1.msra.mxu0 %v300
    %339 = vmatprep.subr.mxu0 0.0
    %340 = vmatpush1.msra.mxu0 %v301
    %341 = vmatprep.subr.mxu0 0.0
    %342 = vmatpush1.msra.mxu0 0.0
    %343 = vmatprep.subr.mxu0 0.0
    %344 = vmatpush1.msra.mxu0 0.0
    %345 = vmatprep.subr.mxu0 0.0
    %346 = vmatpush1.msra.mxu0 0.0
    %347 = vmatprep.subr.mxu0 0.0
    %348 = vmatpush1.msra.mxu0 0.0
    %349 = vmatprep.subr.mxu0 0.0
    %350 = vmatpush1.msra.mxu0 0.0
    %351 = vmatprep.subr.mxu0 0.0
    %352 = vmatpush1.msra.mxu0 0.0
    %353 = vmatprep.subr.mxu0 0.0
    %354 = vmatpush1.msra.mxu0 0.0
    %355 = vmatprep.subr.mxu0 0.0
    %356 = vmatpush1.msra.mxu0 0.0
    %357 = vmatprep.subr.mxu0 0.0
    %358 = vmatpush1.msra.mxu0 0.0
    %359 = vmatprep.subr.mxu0 0.0
    %360 = vmatpush1.msra.mxu0 0.0
    %361 = vmatprep.subr.mxu0 0.0
    %362 = vmatpush1.msra.mxu0 0.0
    %363 = vmatprep.subr.mxu0 0.0
    %364 = vmatpush1.msra.mxu0 0.0
    %365 = vmatprep.subr.mxu0 0.0
    %366 = vmatpush1.msra.mxu0 0.0
    %367 = vmatprep.subr.mxu0 0.0
    %368 = vmatpush1.msra.mxu0 0.0
    %369 = vmatprep.subr.mxu0 0.0
    %370 = vmatpush1.msra.mxu0 0.0
    %371 = vmatprep.subr.mxu0 0.0
    %372 = vmatpush1.msra.mxu0 0.0
    %373 = vmatprep.mubr.f32.mxu0 0.0
    %374 = vmatmul.mubr.f32.gmra.mrb[0].mxu0 %v285
    %v375 = vpop.f32.mrb[0].mxu0
    %v376 = vadd.f32 %v307, %v375
    %v377 = vpop.f32.mrb[0].mxu0
    %378 = vdwg.mxu0
    %379 = vst [vmem:[#allocation10] sm:$0xff] %v376
    // Predicated region
    $region46: #{tpu_custom_call.1} parent=1 // pred_check
      _
    $region47: #{tpu_custom_call.1} parent=1 // pred_check_branch
      %381 = sbr.rel (0) target = $region49
    $region48: #{tpu_custom_call.1} parent=1 // pred_region
      %s383 = ssub.s32 128, 128
      %384 = vsyncadd [#allocation4], %s383
      %s386 = sshll.u32 [#allocation10], 4
      %s387 = int_to_ptr.vmem [resolvable:$true] %s386
      %389 = dma.vmem_to_hbm [thread:$0]  %s387, 128, %s7, [#allocation4]
    $region49: #{tpu_custom_call.1} parent=1 // pred_fallthru
      _
    // Predicated region
    $region50: #{tpu_custom_call.1} parent=1 // pred_check
      _
    $region51: #{tpu_custom_call.1} parent=1 // pred_check_branch
      %391 = sbr.rel (0) target = $region53
    $region52: #{tpu_custom_call.1} parent=1 // pred_region
      %392 = dma.done [#allocation4], 128
    $region53: #{tpu_custom_call.1} parent=1 // pred_fallthru
      _
    %393 = vsyncpa [#allocation3], 1
    %394 = vsyncpa [#allocation6], 1
    %395 = vsyncpa [#allocation9], 1
    %396 = vsyncpa [#allocation4], 1

</llo_original>
